<compile_context>
chip_gen: v5e
topology: v5e:2x2
jax: 0.10.0
libtpu: 0.0.40
codegen_flags: <defaults>
</compile_context>

<pallas_src>
import functools
import math

import jax
import jax.numpy as jnp
from jax.experimental import pallas as pl
from jax.experimental.pallas import tpu as pltpu


def _round_up(x, m):
    return (x + m - 1) // m * m


# ---------------------------------------------------------------------------
# Layer 1 (+ fused next-layer projection):
#   support2 = relu(adj @ support1 + b1) @ W2
# adj is streamed as (T, T) tiles; b1 / W2 stay resident in VMEM; support1 is
# either fully resident (sliced with pl.ds) or streamed as (T, f_pad) tiles.
# ---------------------------------------------------------------------------
def _layer1_kernel(adj_ref, s1_ref, b1_ref, w2_ref, o_ref, acc_ref,
                   *, stream_support):
    k = pl.program_id(1)

    @pl.when(k == 0)
    def _():
        acc_ref[...] = jnp.zeros_like(acc_ref)

    if stream_support:
        s1 = s1_ref[...]
    else:
        tk = adj_ref.shape[1]
        start = pl.multiple_of(k * tk, tk)
        s1 = s1_ref[pl.ds(start, tk), :]
    acc_ref[...] += jnp.dot(adj_ref[...], s1, preferred_element_type=jnp.float32)

    @pl.when(k == pl.num_programs(1) - 1)
    def _():
        h = jnp.maximum(acc_ref[...] + b1_ref[...], 0.0)
        o_ref[...] = jnp.dot(
            h.astype(w2_ref.dtype), w2_ref[...], preferred_element_type=jnp.float32
        ).astype(o_ref.dtype)


# ---------------------------------------------------------------------------
# Layer 2 (+ fused per-row L2 normalize):
#   out = normalize(adj @ support2 + b2, dim=1)
# ---------------------------------------------------------------------------
def _layer2_kernel(adj_ref, s2_ref, b2_ref, o_ref, acc_ref, *, stream_support):
    k = pl.program_id(1)

    @pl.when(k == 0)
    def _():
        acc_ref[...] = jnp.zeros_like(acc_ref)

    if stream_support:
        s2 = s2_ref[...]
    else:
        tk = adj_ref.shape[1]
        start = pl.multiple_of(k * tk, tk)
        s2 = s2_ref[pl.ds(start, tk), :]
    acc_ref[...] += jnp.dot(adj_ref[...], s2, preferred_element_type=jnp.float32)

    @pl.when(k == pl.num_programs(1) - 1)
    def _():
        y = acc_ref[...] + b2_ref[...]
        sq = jnp.sum(y * y, axis=1, keepdims=True)
        # 1 / max(||y||, 1e-12)  ==  rsqrt(max(||y||^2, 1e-24)); rsqrt -> EUP.
        inv = jax.lax.rsqrt(jnp.maximum(sq, 1e-24))
        o_ref[...] = (y * inv).astype(o_ref.dtype)


@functools.partial(
    jax.jit, static_argnames=("compute_dtype", "tile", "stream_support"))
def gcns_forward(x, adj, w1, b1, w2, b2, *,
                 compute_dtype=jnp.float32, tile=512, stream_support=None):
    hp = jax.lax.Precision.HIGHEST
    x = jnp.asarray(x, jnp.float32)
    N = x.shape[0]
    nhid = w1.shape[1]

    f_pad = _round_up(nhid, 128)                # lane-dense feature dim
    t = min(tile, _round_up(N, 128))            # square adj tile (TM == TK)
    n_pad = _round_up(N, t)
    grid = (n_pad // t, n_pad // t)             # (row tiles, reduction tiles)
    isz = jnp.dtype(compute_dtype).itemsize

    # Resident support (one DMA total) if it fits a conservative VMEM budget,
    # otherwise stream (t, f_pad) tiles along the reduction axis.
    if stream_support is None:
        fixed_bytes = (2 * t * t * isz            # adj double buffer
                       + 2 * t * f_pad * isz      # output double buffer
                       + t * f_pad * 4            # f32 accumulator
                       + 2 * f_pad * f_pad * isz  # resident W2
                       + 4 * f_pad * 4)           # biases
        stream_support = fixed_bytes + 2 * n_pad * f_pad * isz > 40 * 1024 * 1024

    # ---- tiny dense projection x @ W1 hoisted out of the adj loop ----------
    support1 = jnp.dot(x, jnp.asarray(w1, jnp.float32), precision=hp)     # (N, nhid)
    support1 = jnp.pad(support1, ((0, n_pad - N), (0, f_pad - nhid)))
    support1 = support1.astype(compute_dtype)

    adj_p = jnp.pad(jnp.asarray(adj, jnp.float32),
                    ((0, n_pad - N), (0, n_pad - N))).astype(compute_dtype)
    b1_p = jnp.pad(jnp.asarray(b1, jnp.float32).reshape(1, -1),
                   ((0, 0), (0, f_pad - nhid)))
    b2_p = jnp.pad(jnp.asarray(b2, jnp.float32).reshape(1, -1),
                   ((0, 0), (0, f_pad - nhid)))
    w2_p = jnp.pad(jnp.asarray(w2, jnp.float32),
                   ((0, f_pad - nhid), (0, f_pad - nhid))).astype(compute_dtype)

    adj_spec = pl.BlockSpec((t, t), lambda i, k: (i, k))
    resident = lambda a: pl.BlockSpec(a.shape, lambda i, k, _n=a.ndim: (0,) * _n)
    if stream_support:
        support_spec = pl.BlockSpec((t, f_pad), lambda i, k: (k, 0))
    else:
        support_spec = resident(support1)
    out_spec = pl.BlockSpec((t, f_pad), lambda i, k: (i, 0))
    cparams = pltpu.CompilerParams(
        dimension_semantics=("parallel", "arbitrary"),
        vmem_limit_bytes=48 * 1024 * 1024,      # stays inside v7x's 64 MiB VMEM
    )

    # ---- layer 1: support2 = relu(adj @ support1 + b1) @ W2 ----------------
    support2 = pl.pallas_call(
        functools.partial(_layer1_kernel, stream_support=stream_support),
        out_shape=jax.ShapeDtypeStruct((n_pad, f_pad), compute_dtype),
        grid_spec=pltpu.PrefetchScalarGridSpec(
            num_scalar_prefetch=0,
            grid=grid,
            in_specs=[adj_spec, support_spec, resident(b1_p), resident(w2_p)],
            out_specs=out_spec,
            scratch_shapes=[pltpu.VMEM((t, f_pad), jnp.float32)],
        ),
        compiler_params=cparams,
        cost_estimate=pl.CostEstimate(
            flops=2 * n_pad * n_pad * f_pad + 2 * n_pad * f_pad * f_pad,
            transcendentals=0,
            bytes_accessed=n_pad * n_pad * isz + 3 * n_pad * f_pad * isz,
        ),
    )(adj_p, support1, b1_p, w2_p)

    if stream_support:
        s2_spec = pl.BlockSpec((t, f_pad), lambda i, k: (k, 0))
    else:
        s2_spec = resident(support2)

    # ---- layer 2: out = normalize(adj @ support2 + b2) ---------------------
    out_p = pl.pallas_call(
        functools.partial(_layer2_kernel, stream_support=stream_support),
        out_shape=jax.ShapeDtypeStruct((n_pad, f_pad), jnp.float32),
        grid_spec=pltpu.PrefetchScalarGridSpec(
            num_scalar_prefetch=0,
            grid=grid,
            in_specs=[adj_spec, s2_spec, resident(b2_p)],
            out_specs=out_spec,
            scratch_shapes=[pltpu.VMEM((t, f_pad), jnp.float32)],
        ),
        compiler_params=cparams,
        cost_estimate=pl.CostEstimate(
            flops=2 * n_pad * n_pad * f_pad + 4 * n_pad * f_pad,
            transcendentals=n_pad,
            bytes_accessed=n_pad * n_pad * isz + n_pad * f_pad * (isz + 4),
        ),
    )(adj_p, support2, b2_p)

    return out_p[:N, :nhid]


def init_params(key, nfeat, nhid):
    # Matches GraphConvolution.reset_parameters_uniform:
    #   stdv = 1/sqrt(out_features); W,b ~ U(-stdv, stdv)
    k1, k2, k3, k4 = jax.random.split(key, 4)
    s1 = 1.0 / math.sqrt(nhid)
    w1 = jax.random.uniform(k1, (nfeat, nhid), jnp.float32, -s1, s1)
    b1 = jax.random.uniform(k2, (1, nhid), jnp.float32, -s1, s1)
    s2 = 1.0 / math.sqrt(nhid)
    w2 = jax.random.uniform(k3, (nhid, nhid), jnp.float32, -s2, s2)
    b2 = jax.random.uniform(k4, (1, nhid), jnp.float32, -s2, s2)
    return w1, b1, w2, b2


def _make_graph(key, N, nfeat):
    kx, kadj = jax.random.split(key)
    x = jax.random.normal(kx, (N, nfeat), jnp.float32)
    # Deterministic symmetric-normalized adjacency with self-loops.
    a = (jax.random.uniform(kadj, (N, N)) > 0.5).astype(jnp.float32)
    a = jnp.maximum(a, a.T)
    a = a + jnp.eye(N, dtype=jnp.float32)
    dinv = 1.0 / jnp.sqrt(jnp.sum(a, axis=1))
    adj = a * dinv[:, None] * dinv[None, :]
    return x, adj


def _ref_forward(x, adj, w1, b1, w2, b2):
    hp = jax.lax.Precision.HIGHEST
    h = jnp.maximum(
        jnp.dot(adj, jnp.dot(x, w1, precision=hp), precision=hp) + b1, 0.0)
    y = jnp.dot(adj, jnp.dot(h, w2, precision=hp), precision=hp) + b2
    n = jnp.maximum(jnp.linalg.norm(y, axis=1, keepdims=True), 1e-12)
    return y / n


if __name__ == "__main__":
    key = jax.random.PRNGKey(0)
    kg, kp, kg2 = jax.random.split(key, 3)

    # Small graph: 8 nodes, 16 features, 32 hidden.
    N, nfeat, nhid = 8, 16, 32
    x, adj = _make_graph(kg, N, nfeat)
    w1, b1, w2, b2 = init_params(kp, nfeat, nhid)
    ref = _ref_forward(x, adj, w1, b1, w2, b2)

    # f32 path, resident support (tight tolerance).
    out = gcns_forward(x, adj, w1, b1, w2, b2, compute_dtype=jnp.float32)
    jax.block_until_ready(out)
    assert out.shape == (N, nhid)
    assert jnp.allclose(out, ref, atol=1e-5, rtol=1e-5)

    # bf16-streamed adjacency path (f32 accumulation).
    out_bf16 = gcns_forward(x, adj, w1, b1, w2, b2, compute_dtype=jnp.bfloat16)
    jax.block_until_ready(out_bf16)
    assert out_bf16.shape == (N, nhid)
    assert jnp.allclose(out_bf16, ref, atol=5e-2, rtol=5e-2)

    # Multi-tile grid + streamed-support path (exercises the reduction loop).
    N2 = 384
    x2, adj2 = _make_graph(kg2, N2, nfeat)
    ref2 = _ref_forward(x2, adj2, w1, b1, w2, b2)
    out2 = gcns_forward(x2, adj2, w1, b1, w2, b2,
                        compute_dtype=jnp.float32, tile=128, stream_support=True)
    jax.block_until_ready(out2)
    assert out2.shape == (N2, nhid)
    assert jnp.allclose(out2, ref2, atol=1e-4, rtol=1e-4)

    print("KERNEL_OK")
</pallas_src>

<mosaic_0001>
module attributes {stable_mosaic.version = 11 : i64} {
  func.func @_layer1_kernel(%arg0: i32, %arg1: i32, %arg2: memref<128x128xf32, #tpu.memory_space<vmem>>, %arg3: memref<128x128xf32, #tpu.memory_space<vmem>>, %arg4: memref<1x128xf32, #tpu.memory_space<vmem>>, %arg5: memref<128x128xf32, #tpu.memory_space<vmem>>, %arg6: memref<128x128xf32, #tpu.memory_space<vmem>>, %arg7: memref<128x128xf32, #tpu.memory_space<vmem>>) attributes {dimension_semantics = [#tpu.dimension_semantics<parallel>, #tpu.dimension_semantics<arbitrary>], iteration_bounds = array<i64: 1, 1>, scalar_prefetch = 0 : i64, scratch_operands = 1 : i64, tpu.core_type = #tpu.core_type<tc>, window_params = [{transform_indices = @transform_0, window_bounds = array<i64: 128, 128>}, {pipeline_mode = #tpu.pipeline_mode<synchronous>, transform_indices = @transform_1, window_bounds = array<i64: 128, 128>}, {pipeline_mode = #tpu.pipeline_mode<synchronous>, transform_indices = @transform_2, window_bounds = array<i64: 1, 128>}, {pipeline_mode = #tpu.pipeline_mode<synchronous>, transform_indices = @transform_3, window_bounds = array<i64: 128, 128>}, {transform_indices = @transform_4, window_bounds = array<i64: 128, 128>}]} {
    %c0_i32 = arith.constant 0 : i32
    %0 = arith.cmpi eq, %arg1, %c0_i32 : i32
    %1 = arith.extui %0 : i1 to i32
    %c0_i32_0 = arith.constant 0 : i32
    %2 = arith.cmpi ne, %1, %c0_i32_0 : i32
    scf.if %2 {
      %cst_9 = arith.constant 0.000000e+00 : f32
      %15 = vector.broadcast %cst_9 : f32 to vector<128x128xf32>
      %c0_10 = arith.constant 0 : index
      %c0_11 = arith.constant 0 : index
      %16 = vector.load %arg7[%c0_10, %c0_11] : memref<128x128xf32, #tpu.memory_space<vmem>>, vector<128x128xf32>
      tpu.vector_store %arg7[%c0_10, %c0_11], %15 {strides = array<i32>} : memref<128x128xf32, #tpu.memory_space<vmem>>, vector<128x128xf32>,
    } else {
    }
    %c128_i32 = arith.constant 128 : i32
    %3 = arith.muli %arg1, %c128_i32 : i32
    %4 = tpu.assume_multiple %3, 128 : i32
    %5 = arith.index_cast %4 : i32 to index
    %c0 = arith.constant 0 : index
    %6 = vector.load %arg3[%5, %c0] : memref<128x128xf32, #tpu.memory_space<vmem>>, vector<128x128xf32>
    %c0_1 = arith.constant 0 : index
    %c0_2 = arith.constant 0 : index
    %7 = vector.load %arg7[%c0_1, %c0_2] : memref<128x128xf32, #tpu.memory_space<vmem>>, vector<128x128xf32>
    %c0_3 = arith.constant 0 : index
    %c0_4 = arith.constant 0 : index
    %8 = vector.load %arg2[%c0_3, %c0_4] : memref<128x128xf32, #tpu.memory_space<vmem>>, vector<128x128xf32>
    %cst = arith.constant dense<0.000000e+00> : vector<128x128xf32>
    %9 = tpu.matmul %8, %6, %cst {dimension_numbers = #tpu.dot_dimension_numbers<[1], [0], [0], [1], [0, 0, 1, 1], [], []>} : vector<128x128xf32>, vector<128x128xf32>, vector<128x128xf32> -> vector<128x128xf32>
    %10 = arith.addf %7, %9 : vector<128x128xf32>
    %c0_5 = arith.constant 0 : index
    %c0_6 = arith.constant 0 : index
    %11 = vector.load %arg7[%c0_5, %c0_6] : memref<128x128xf32, #tpu.memory_space<vmem>>, vector<128x128xf32>
    tpu.vector_store %arg7[%c0_5, %c0_6], %10 {strides = array<i32>} : memref<128x128xf32, #tpu.memory_space<vmem>>, vector<128x128xf32>,
    %c0_i32_7 = arith.constant 0 : i32
    %12 = arith.cmpi eq, %arg1, %c0_i32_7 : i32
    %13 = arith.extui %12 : i1 to i32
    %c0_i32_8 = arith.constant 0 : i32
    %14 = arith.cmpi ne, %13, %c0_i32_8 : i32
    scf.if %14 {
      %c0_9 = arith.constant 0 : index
      %c0_10 = arith.constant 0 : index
      %15 = vector.load %arg7[%c0_9, %c0_10] : memref<128x128xf32, #tpu.memory_space<vmem>>, vector<128x128xf32>
      %c0_11 = arith.constant 0 : index
      %c0_12 = arith.constant 0 : index
      %16 = vector.load %arg4[%c0_11, %c0_12] : memref<1x128xf32, #tpu.memory_space<vmem>>, vector<1x128xf32>
      %17 = vector.broadcast %16 : vector<1x128xf32> to vector<128x128xf32>
      %18 = arith.addf %15, %17 : vector<128x128xf32>
      %cst_13 = arith.constant 0.000000e+00 : f32
      %19 = vector.broadcast %cst_13 : f32 to vector<128x128xf32>
      %20 = arith.maximumf %18, %19 : vector<128x128xf32>
      %c0_14 = arith.constant 0 : index
      %c0_15 = arith.constant 0 : index
      %21 = vector.load %arg5[%c0_14, %c0_15] : memref<128x128xf32, #tpu.memory_space<vmem>>, vector<128x128xf32>
      %cst_16 = arith.constant dense<0.000000e+00> : vector<128x128xf32>
      %22 = tpu.matmul %20, %21, %cst_16 {dimension_numbers = #tpu.dot_dimension_numbers<[1], [0], [0], [1], [0, 0, 1, 1], [], []>} : vector<128x128xf32>, vector<128x128xf32>, vector<128x128xf32> -> vector<128x128xf32>
      %c0_17 = arith.constant 0 : index
      %c0_18 = arith.constant 0 : index
      %23 = vector.load %arg6[%c0_17, %c0_18] : memref<128x128xf32, #tpu.memory_space<vmem>>, vector<128x128xf32>
      tpu.vector_store %arg6[%c0_17, %c0_18], %22 {strides = array<i32>} : memref<128x128xf32, #tpu.memory_space<vmem>>, vector<128x128xf32>,
    } else {
    }
    return
  }
  func.func @transform_0(%arg0: i32, %arg1: i32) -> (i32, i32) {
    %c0_i32 = arith.constant 0 : i32
    return %arg0, %arg1 : i32, i32
  }
  func.func @transform_1(%arg0: i32, %arg1: i32) -> (i32, i32) {
    %c0_i32 = arith.constant 0 : i32
    %c0_i32_0 = arith.constant 0 : i32
    %c0_i32_1 = arith.constant 0 : i32
    return %c0_i32, %c0_i32_0 : i32, i32
  }
  func.func @transform_2(%arg0: i32, %arg1: i32) -> (i32, i32) {
    %c0_i32 = arith.constant 0 : i32
    %c0_i32_0 = arith.constant 0 : i32
    %c0_i32_1 = arith.constant 0 : i32
    return %c0_i32, %c0_i32_0 : i32, i32
  }
  func.func @transform_3(%arg0: i32, %arg1: i32) -> (i32, i32) {
    %c0_i32 = arith.constant 0 : i32
    %c0_i32_0 = arith.constant 0 : i32
    %c0_i32_1 = arith.constant 0 : i32
    return %c0_i32, %c0_i32_0 : i32, i32
  }
  func.func @transform_4(%arg0: i32, %arg1: i32) -> (i32, i32) {
    %c0_i32 = arith.constant 0 : i32
    %c0_i32_0 = arith.constant 0 : i32
    return %arg0, %c0_i32 : i32, i32
  }
}

module attributes {stable_mosaic.version = 11 : i64} {
  func.func @_layer2_kernel(%arg0: i32, %arg1: i32, %arg2: memref<128x128xf32, #tpu.memory_space<vmem>>, %arg3: memref<128x128xf32, #tpu.memory_space<vmem>>, %arg4: memref<1x128xf32, #tpu.memory_space<vmem>>, %arg5: memref<128x128xf32, #tpu.memory_space<vmem>>, %arg6: memref<128x128xf32, #tpu.memory_space<vmem>>) attributes {dimension_semantics = [#tpu.dimension_semantics<parallel>, #tpu.dimension_semantics<arbitrary>], iteration_bounds = array<i64: 1, 1>, scalar_prefetch = 0 : i64, scratch_operands = 1 : i64, tpu.core_type = #tpu.core_type<tc>, window_params = [{transform_indices = @transform_0, window_bounds = array<i64: 128, 128>}, {pipeline_mode = #tpu.pipeline_mode<synchronous>, transform_indices = @transform_1, window_bounds = array<i64: 128, 128>}, {pipeline_mode = #tpu.pipeline_mode<synchronous>, transform_indices = @transform_2, window_bounds = array<i64: 1, 128>}, {transform_indices = @transform_3, window_bounds = array<i64: 128, 128>}]} {
    %c0_i32 = arith.constant 0 : i32
    %0 = arith.cmpi eq, %arg1, %c0_i32 : i32
    %1 = arith.extui %0 : i1 to i32
    %c0_i32_0 = arith.constant 0 : i32
    %2 = arith.cmpi ne, %1, %c0_i32_0 : i32
    scf.if %2 {
      %cst_9 = arith.constant 0.000000e+00 : f32
      %15 = vector.broadcast %cst_9 : f32 to vector<128x128xf32>
      %c0_10 = arith.constant 0 : index
      %c0_11 = arith.constant 0 : index
      %16 = vector.load %arg6[%c0_10, %c0_11] : memref<128x128xf32, #tpu.memory_space<vmem>>, vector<128x128xf32>
      tpu.vector_store %arg6[%c0_10, %c0_11], %15 {strides = array<i32>} : memref<128x128xf32, #tpu.memory_space<vmem>>, vector<128x128xf32>,
    } else {
    }
    %c128_i32 = arith.constant 128 : i32
    %3 = arith.muli %arg1, %c128_i32 : i32
    %4 = tpu.assume_multiple %3, 128 : i32
    %5 = arith.index_cast %4 : i32 to index
    %c0 = arith.constant 0 : index
    %6 = vector.load %arg3[%5, %c0] : memref<128x128xf32, #tpu.memory_space<vmem>>, vector<128x128xf32>
    %c0_1 = arith.constant 0 : index
    %c0_2 = arith.constant 0 : index
    %7 = vector.load %arg6[%c0_1, %c0_2] : memref<128x128xf32, #tpu.memory_space<vmem>>, vector<128x128xf32>
    %c0_3 = arith.constant 0 : index
    %c0_4 = arith.constant 0 : index
    %8 = vector.load %arg2[%c0_3, %c0_4] : memref<128x128xf32, #tpu.memory_space<vmem>>, vector<128x128xf32>
    %cst = arith.constant dense<0.000000e+00> : vector<128x128xf32>
    %9 = tpu.matmul %8, %6, %cst {dimension_numbers = #tpu.dot_dimension_numbers<[1], [0], [0], [1], [0, 0, 1, 1], [], []>} : vector<128x128xf32>, vector<128x128xf32>, vector<128x128xf32> -> vector<128x128xf32>
    %10 = arith.addf %7, %9 : vector<128x128xf32>
    %c0_5 = arith.constant 0 : index
    %c0_6 = arith.constant 0 : index
    %11 = vector.load %arg6[%c0_5, %c0_6] : memref<128x128xf32, #tpu.memory_space<vmem>>, vector<128x128xf32>
    tpu.vector_store %arg6[%c0_5, %c0_6], %10 {strides = array<i32>} : memref<128x128xf32, #tpu.memory_space<vmem>>, vector<128x128xf32>,
    %c0_i32_7 = arith.constant 0 : i32
    %12 = arith.cmpi eq, %arg1, %c0_i32_7 : i32
    %13 = arith.extui %12 : i1 to i32
    %c0_i32_8 = arith.constant 0 : i32
    %14 = arith.cmpi ne, %13, %c0_i32_8 : i32
    scf.if %14 {
      %c0_9 = arith.constant 0 : index
      %c0_10 = arith.constant 0 : index
      %15 = vector.load %arg6[%c0_9, %c0_10] : memref<128x128xf32, #tpu.memory_space<vmem>>, vector<128x128xf32>
      %c0_11 = arith.constant 0 : index
      %c0_12 = arith.constant 0 : index
      %16 = vector.load %arg4[%c0_11, %c0_12] : memref<1x128xf32, #tpu.memory_space<vmem>>, vector<1x128xf32>
      %17 = vector.broadcast %16 : vector<1x128xf32> to vector<128x128xf32>
      %18 = arith.addf %15, %17 : vector<128x128xf32>
      %19 = arith.mulf %18, %18 : vector<128x128xf32>
      %cst_13 = arith.constant dense<0.000000e+00> : vector<128xf32>
      %20 = vector.multi_reduction <add>, %19, %cst_13 [1] : vector<128x128xf32> to vector<128xf32>
      %21 = vector.shape_cast %20 : vector<128xf32> to vector<128x1xf32>
      %cst_14 = arith.constant 1.000000e-24 : f32
      %22 = vector.broadcast %cst_14 : f32 to vector<128x1xf32>
      %23 = arith.maximumf %21, %22 : vector<128x1xf32>
      %24 = math.rsqrt %23 : vector<128x1xf32>
      %25 = vector.broadcast %24 : vector<128x1xf32> to vector<128x128xf32>
      %26 = arith.mulf %18, %25 : vector<128x128xf32>
      %c0_15 = arith.constant 0 : index
      %c0_16 = arith.constant 0 : index
      %27 = vector.load %arg5[%c0_15, %c0_16] : memref<128x128xf32, #tpu.memory_space<vmem>>, vector<128x128xf32>
      tpu.vector_store %arg5[%c0_15, %c0_16], %26 {strides = array<i32>} : memref<128x128xf32, #tpu.memory_space<vmem>>, vector<128x128xf32>,
    } else {
    }
    return
  }
  func.func @transform_0(%arg0: i32, %arg1: i32) -> (i32, i32) {
    %c0_i32 = arith.constant 0 : i32
    return %arg0, %arg1 : i32, i32
  }
  func.func @transform_1(%arg0: i32, %arg1: i32) -> (i32, i32) {
    %c0_i32 = arith.constant 0 : i32
    %c0_i32_0 = arith.constant 0 : i32
    %c0_i32_1 = arith.constant 0 : i32
    return %c0_i32, %c0_i32_0 : i32, i32
  }
  func.func @transform_2(%arg0: i32, %arg1: i32) -> (i32, i32) {
    %c0_i32 = arith.constant 0 : i32
    %c0_i32_0 = arith.constant 0 : i32
    %c0_i32_1 = arith.constant 0 : i32
    return %c0_i32, %c0_i32_0 : i32, i32
  }
  func.func @transform_3(%arg0: i32, %arg1: i32) -> (i32, i32) {
    %c0_i32 = arith.constant 0 : i32
    %c0_i32_0 = arith.constant 0 : i32
    return %arg0, %c0_i32 : i32, i32
  }
}

</mosaic_0001>

<llo_original>
// kernel: gcns_forward.3
$region0: #{gcns_forward.3}
  #allocation0 [shape = 'u32[]', space=smem, size = 0x4, offset = 0x4, fixed_abs, tag = 'smem constant byte address 0x4 - core index']
  #allocation1 [shape = 'u32[72,128]{1,0:T(1,128)}', space=vmem, size = 0x9000, scoped, tag = 'internal scratch']
  #allocation2 [shape = 'f32[128,128]{1,0:T(8,128)}', space=vmem, size = 0x10000, scoped, tag = 'scratch operand']
  %s0 = inlined_call_operand.vmem [shape: f32[128,128], index: 0, kind: input, shape index: {}]
  %s1 = inlined_call_operand.vmem [shape: f32[128,128], index: 1, kind: input, shape index: {}]
  %s2 = inlined_call_operand.vmem [shape: f32[1,128], index: 2, kind: input, shape index: {}]
  %s3 = inlined_call_operand.vmem [shape: f32[128,128], index: 3, kind: output, shape index: {}]
  %s4 = sld [smem:[#allocation0]]
  $region30: #{gcns_forward.3} parent=0
    _
  %s6 = ssub.s32 1, %s4
  %s7 = scalar_select 0, %s6, %s4
  // Predicated region
  $region2: #{gcns_forward.3} parent=0 // pred_check
    _
  $region3: #{gcns_forward.3} parent=0 // pred_check_branch
    %9 = sbr.rel (0) target = $region5
  $region4: #{gcns_forward.3} parent=0 // pred_region
    _
  $region5: #{gcns_forward.3} parent=0 // pred_fallthru
    _
  // Predicated region
  $region6: #{gcns_forward.3} parent=0 // pred_check
    _
  $region7: #{gcns_forward.3} parent=0 // pred_check_branch
    %11 = sbr.rel (0) target = $region9
  $region8: #{gcns_forward.3} parent=0 // pred_region
    _
  $region9: #{gcns_forward.3} parent=0 // pred_fallthru
    _
  // Predicated region
  $region10: #{gcns_forward.3} parent=0 // pred_check
    _
  $region11: #{gcns_forward.3} parent=0 // pred_check_branch
    %13 = sbr.rel (0) target = $region13
  $region12: #{gcns_forward.3} parent=0 // pred_region
    _
  $region13: #{gcns_forward.3} parent=0 // pred_fallthru
    _
  %p14 = scmp.eq.s32.totalorder 0, 0
  // Predicated region
  $region14: #{gcns_forward.3} parent=0 // pred_check
    %p15 = pneg %p14
  $region15: #{gcns_forward.3} parent=0 // pred_check_branch
    %17 = sbr.rel (%p15) target = $region17
  $region16: #{gcns_forward.3} parent=0 // pred_region
    %18 = vst [vmem:[#allocation2] sm:$0xff] 0.0
    %19 = vst [vmem:[#allocation2 + $0x8] sm:$0xff] 0.0
    %20 = vst [vmem:[#allocation2 + $0x10] sm:$0xff] 0.0
    %21 = vst [vmem:[#allocation2 + $0x18] sm:$0xff] 0.0
    %22 = vst [vmem:[#allocation2 + $0x20] sm:$0xff] 0.0
    %23 = vst [vmem:[#allocation2 + $0x28] sm:$0xff] 0.0
    %24 = vst [vmem:[#allocation2 + $0x30] sm:$0xff] 0.0
    %25 = vst [vmem:[#allocation2 + $0x38] sm:$0xff] 0.0
    %26 = vst [vmem:[#allocation2 + $0x40] sm:$0xff] 0.0
    %27 = vst [vmem:[#allocation2 + $0x48] sm:$0xff] 0.0
    %28 = vst [vmem:[#allocation2 + $0x50] sm:$0xff] 0.0
    %29 = vst [vmem:[#allocation2 + $0x58] sm:$0xff] 0.0
    %30 = vst [vmem:[#allocation2 + $0x60] sm:$0xff] 0.0
    %31 = vst [vmem:[#allocation2 + $0x68] sm:$0xff] 0.0
    %32 = vst [vmem:[#allocation2 + $0x70] sm:$0xff] 0.0
    %33 = vst [vmem:[#allocation2 + $0x78] sm:$0xff] 0.0
  $region17: #{gcns_forward.3} parent=0 // pred_fallthru
    _
  %s34 = smul.u32 0, 128
  %s35 = scalar_lea.vmem %s1, %s34
  %v36 = vld [vmem:[%s35] sm:$0xff]
  %v37 = vld [vmem:[%s35 + $0x8] sm:$0xff]
  %v38 = vld [vmem:[%s35 + $0x10] sm:$0xff]
  %v39 = vld [vmem:[%s35 + $0x18] sm:$0xff]
  %v40 = vld [vmem:[%s35 + $0x20] sm:$0xff]
  %v41 = vld [vmem:[%s35 + $0x28] sm:$0xff]
  %v42 = vld [vmem:[%s35 + $0x30] sm:$0xff]
  %v43 = vld [vmem:[%s35 + $0x38] sm:$0xff]
  %v44 = vld [vmem:[%s35 + $0x40] sm:$0xff]
  %v45 = vld [vmem:[%s35 + $0x48] sm:$0xff]
  %v46 = vld [vmem:[%s35 + $0x50] sm:$0xff]
  %v47 = vld [vmem:[%s35 + $0x58] sm:$0xff]
  %v48 = vld [vmem:[%s35 + $0x60] sm:$0xff]
  %v49 = vld [vmem:[%s35 + $0x68] sm:$0xff]
  %v50 = vld [vmem:[%s35 + $0x70] sm:$0xff]
  %v51 = vld [vmem:[%s35 + $0x78] sm:$0xff]
  %v52 = vld [vmem:[#allocation2] sm:$0xff]
  %v53 = vld [vmem:[#allocation2 + $0x8] sm:$0xff]
  %v54 = vld [vmem:[#allocation2 + $0x10] sm:$0xff]
  %v55 = vld [vmem:[#allocation2 + $0x18] sm:$0xff]
  %v56 = vld [vmem:[#allocation2 + $0x20] sm:$0xff]
  %v57 = vld [vmem:[#allocation2 + $0x28] sm:$0xff]
  %v58 = vld [vmem:[#allocation2 + $0x30] sm:$0xff]
  %v59 = vld [vmem:[#allocation2 + $0x38] sm:$0xff]
  %v60 = vld [vmem:[#allocation2 + $0x40] sm:$0xff]
  %v61 = vld [vmem:[#allocation2 + $0x48] sm:$0xff]
  %v62 = vld [vmem:[#allocation2 + $0x50] sm:$0xff]
  %v63 = vld [vmem:[#allocation2 + $0x58] sm:$0xff]
  %v64 = vld [vmem:[#allocation2 + $0x60] sm:$0xff]
  %v65 = vld [vmem:[#allocation2 + $0x68] sm:$0xff]
  %v66 = vld [vmem:[#allocation2 + $0x70] sm:$0xff]
  %v67 = vld [vmem:[#allocation2 + $0x78] sm:$0xff]
  %v68 = vld [vmem:[%s0] sm:$0xff]
  %v69 = vld [vmem:[%s0 + $0x8] sm:$0xff]
  %v70 = vld [vmem:[%s0 + $0x10] sm:$0xff]
  %v71 = vld [vmem:[%s0 + $0x18] sm:$0xff]
  %v72 = vld [vmem:[%s0 + $0x20] sm:$0xff]
  %v73 = vld [vmem:[%s0 + $0x28] sm:$0xff]
  %v74 = vld [vmem:[%s0 + $0x30] sm:$0xff]
  %v75 = vld [vmem:[%s0 + $0x38] sm:$0xff]
  %v76 = vld [vmem:[%s0 + $0x40] sm:$0xff]
  %v77 = vld [vmem:[%s0 + $0x48] sm:$0xff]
  %v78 = vld [vmem:[%s0 + $0x50] sm:$0xff]
  %v79 = vld [vmem:[%s0 + $0x58] sm:$0xff]
  %v80 = vld [vmem:[%s0 + $0x60] sm:$0xff]
  %v81 = vld [vmem:[%s0 + $0x68] sm:$0xff]
  %v82 = vld [vmem:[%s0 + $0x70] sm:$0xff]
  %v83 = vld [vmem:[%s0 + $0x78] sm:$0xff]
  %84 = vmatpush.msra.mxu0 %v51
  %85 = vmatpush.msra.mxu0 %v50
  %86 = vmatpush.msra.mxu0 %v49
  %87 = vmatpush.msra.mxu0 %v48
  %88 = vmatpush.msra.mxu0 %v47
  %89 = vmatpush.msra.mxu0 %v46
  %90 = vmatpush.msra.mxu0 %v45
  %91 = vmatpush.msra.mxu0 %v44
  %92 = vmatpush.msra.mxu0 %v43
  %93 = vmatpush.msra.mxu0 %v42
  %94 = vmatpush.msra.mxu0 %v41
  %95 = vmatpush.msra.mxu0 %v40
  %96 = vmatpush.msra.mxu0 %v39
  %97 = vmatpush.msra.mxu0 %v38
  %98 = vmatpush.msra.mxu0 %v37
  %99 = vmatpush.msra.mxu0 %v36
  %100 = vmatmul.f32.gmra.mxu0 %v68
  %v101 = vpop.f32.mrf.mxu0
  %v102 = vadd.f32 0.0, %v101
  %103 = vmatmul.f32.gmra.mxu0 %v69
  %v104 = vpop.f32.mrf.mxu0
  %v105 = vadd.f32 0.0, %v104
  %106 = vmatmul.f32.gmra.mxu0 %v70
  %v107 = vpop.f32.mrf.mxu0
  %v108 = vadd.f32 0.0, %v107
  %109 = vmatmul.f32.gmra.mxu0 %v71
  %v110 = vpop.f32.mrf.mxu0
  %v111 = vadd.f32 0.0, %v110
  %112 = vmatmul.f32.gmra.mxu0 %v72
  %v113 = vpop.f32.mrf.mxu0
  %v114 = vadd.f32 0.0, %v113
  %115 = vmatmul.f32.gmra.mxu0 %v73
  %v116 = vpop.f32.mrf.mxu0
  %v117 = vadd.f32 0.0, %v116
  %118 = vmatmul.f32.gmra.mxu0 %v74
  %v119 = vpop.f32.mrf.mxu0
  %v120 = vadd.f32 0.0, %v119
  %121 = vmatmul.f32.gmra.mxu0 %v75
  %v122 = vpop.f32.mrf.mxu0
  %v123 = vadd.f32 0.0, %v122
  %124 = vmatmul.f32.gmra.mxu0 %v76
  %v125 = vpop.f32.mrf.mxu0
  %v126 = vadd.f32 0.0, %v125
  %127 = vmatmul.f32.gmra.mxu0 %v77
  %v128 = vpop.f32.mrf.mxu0
  %v129 = vadd.f32 0.0, %v128
  %130 = vmatmul.f32.gmra.mxu0 %v78
  %v131 = vpop.f32.mrf.mxu0
  %v132 = vadd.f32 0.0, %v131
  %133 = vmatmul.f32.gmra.mxu0 %v79
  %v134 = vpop.f32.mrf.mxu0
  %v135 = vadd.f32 0.0, %v134
  %136 = vmatmul.f32.gmra.mxu0 %v80
  %v137 = vpop.f32.mrf.mxu0
  %v138 = vadd.f32 0.0, %v137
  %139 = vmatmul.f32.gmra.mxu0 %v81
  %v140 = vpop.f32.mrf.mxu0
  %v141 = vadd.f32 0.0, %v140
  %142 = vmatmul.f32.gmra.mxu0 %v82
  %v143 = vpop.f32.mrf.mxu0
  %v144 = vadd.f32 0.0, %v143
  %145 = vmatmul.f32.gmra.mxu0 %v83
  %v146 = vpop.f32.mrf.mxu0
  %v147 = vadd.f32 0.0, %v146
  %148 = vdwg.mxu0
  %v149 = vadd.f32 %v52, %v102
  %v150 = vadd.f32 %v53, %v105
  %v151 = vadd.f32 %v54, %v108
  %v152 = vadd.f32 %v55, %v111
  %v153 = vadd.f32 %v56, %v114
  %v154 = vadd.f32 %v57, %v117
  %v155 = vadd.f32 %v58, %v120
  %v156 = vadd.f32 %v59, %v123
  %v157 = vadd.f32 %v60, %v126
  %v158 = vadd.f32 %v61, %v129
  %v159 = vadd.f32 %v62, %v132
  %v160 = vadd.f32 %v63, %v135
  %v161 = vadd.f32 %v64, %v138
  %v162 = vadd.f32 %v65, %v141
  %v163 = vadd.f32 %v66, %v144
  %v164 = vadd.f32 %v67, %v147
  %165 = vst [vmem:[#allocation2] sm:$0xff] %v149
  %166 = vst [vmem:[#allocation2 + $0x8] sm:$0xff] %v150
  %167 = vst [vmem:[#allocation2 + $0x10] sm:$0xff] %v151
  %168 = vst [vmem:[#allocation2 + $0x18] sm:$0xff] %v152
  %169 = vst [vmem:[#allocation2 + $0x20] sm:$0xff] %v153
  %170 = vst [vmem:[#allocation2 + $0x28] sm:$0xff] %v154
  %171 = vst [vmem:[#allocation2 + $0x30] sm:$0xff] %v155
  %172 = vst [vmem:[#allocation2 + $0x38] sm:$0xff] %v156
  %173 = vst [vmem:[#allocation2 + $0x40] sm:$0xff] %v157
  %174 = vst [vmem:[#allocation2 + $0x48] sm:$0xff] %v158
  %175 = vst [vmem:[#allocation2 + $0x50] sm:$0xff] %v159
  %176 = vst [vmem:[#allocation2 + $0x58] sm:$0xff] %v160
  %177 = vst [vmem:[#allocation2 + $0x60] sm:$0xff] %v161
  %178 = vst [vmem:[#allocation2 + $0x68] sm:$0xff] %v162
  %179 = vst [vmem:[#allocation2 + $0x70] sm:$0xff] %v163
  %180 = vst [vmem:[#allocation2 + $0x78] sm:$0xff] %v164
  // Predicated region
  $region18: #{gcns_forward.3} parent=0 // pred_check
    %p181 = pneg %p14
  $region19: #{gcns_forward.3} parent=0 // pred_check_branch
    %183 = sbr.rel (%p181) target = $region21
  $region20: #{gcns_forward.3} parent=0 // pred_region
    %v184 = vld [vmem:[#allocation2] sm:$0xff]
    %v185 = vld [vmem:[#allocation2 + $0x8] sm:$0xff]
    %v186 = vld [vmem:[#allocation2 + $0x10] sm:$0xff]
    %v187 = vld [vmem:[#allocation2 + $0x18] sm:$0xff]
    %v188 = vld [vmem:[#allocation2 + $0x20] sm:$0xff]
    %v189 = vld [vmem:[#allocation2 + $0x28] sm:$0xff]
    %v190 = vld [vmem:[#allocation2 + $0x30] sm:$0xff]
    %v191 = vld [vmem:[#allocation2 + $0x38] sm:$0xff]
    %v192 = vld [vmem:[#allocation2 + $0x40] sm:$0xff]
    %v193 = vld [vmem:[#allocation2 + $0x48] sm:$0xff]
    %v194 = vld [vmem:[#allocation2 + $0x50] sm:$0xff]
    %v195 = vld [vmem:[#allocation2 + $0x58] sm:$0xff]
    %v196 = vld [vmem:[#allocation2 + $0x60] sm:$0xff]
    %v197 = vld [vmem:[#allocation2 + $0x68] sm:$0xff]
    %v198 = vld [vmem:[#allocation2 + $0x70] sm:$0xff]
    %v199 = vld [vmem:[#allocation2 + $0x78] sm:$0xff]
    %v200 = vld [vmem:[%s2] sm:$0x1]
    %v202 = vperm.slane %v200, 0
    %v204 = vadd.f32 %v184, %v202
    %v205 = vadd.f32 %v185, %v202
    %v206 = vadd.f32 %v186, %v202
    %v207 = vadd.f32 %v187, %v202
    %v208 = vadd.f32 %v188, %v202
    %v209 = vadd.f32 %v189, %v202
    %v210 = vadd.f32 %v190, %v202
    %v211 = vadd.f32 %v191, %v202
    %v212 = vadd.f32 %v192, %v202
    %v213 = vadd.f32 %v193, %v202
    %v214 = vadd.f32 %v194, %v202
    %v215 = vadd.f32 %v195, %v202
    %v216 = vadd.f32 %v196, %v202
    %v217 = vadd.f32 %v197, %v202
    %v218 = vadd.f32 %v198, %v202
    %v219 = vadd.f32 %v199, %v202
    %v220 = vmul.f32 %v204, %v204
    %v221 = vmul.f32 %v205, %v205
    %v222 = vmul.f32 %v206, %v206
    %v223 = vmul.f32 %v207, %v207
    %v224 = vmul.f32 %v208, %v208
    %v225 = vmul.f32 %v209, %v209
    %v226 = vmul.f32 %v210, %v210
    %v227 = vmul.f32 %v211, %v211
    %v228 = vmul.f32 %v212, %v212
    %v229 = vmul.f32 %v213, %v213
    %v230 = vmul.f32 %v214, %v214
    %v231 = vmul.f32 %v215, %v215
    %v232 = vmul.f32 %v216, %v216
    %v233 = vmul.f32 %v217, %v217
    %v234 = vmul.f32 %v218, %v218
    %v235 = vmul.f32 %v219, %v219
    %236 = vadd.xlane.f32.xlu0 %v220
    %v237 = vpop.xlane.xlu0 %236
    %238 = vadd.xlane.f32.xlu0 %v221
    %v239 = vpop.xlane.xlu0 %238
    %240 = vadd.xlane.f32.xlu0 %v222
    %v241 = vpop.xlane.xlu0 %240
    %242 = vadd.xlane.f32.xlu0 %v223
    %v243 = vpop.xlane.xlu0 %242
    %244 = vadd.xlane.f32.xlu0 %v224
    %v245 = vpop.xlane.xlu0 %244
    %246 = vadd.xlane.f32.xlu0 %v225
    %v247 = vpop.xlane.xlu0 %246
    %248 = vadd.xlane.f32.xlu0 %v226
    %v249 = vpop.xlane.xlu0 %248
    %250 = vadd.xlane.f32.xlu0 %v227
    %v251 = vpop.xlane.xlu0 %250
    %252 = vadd.xlane.f32.xlu0 %v228
    %v253 = vpop.xlane.xlu0 %252
    %254 = vadd.xlane.f32.xlu0 %v229
    %v255 = vpop.xlane.xlu0 %254
    %256 = vadd.xlane.f32.xlu0 %v230
    %v257 = vpop.xlane.xlu0 %256
    %258 = vadd.xlane.f32.xlu0 %v231
    %v259 = vpop.xlane.xlu0 %258
    %260 = vadd.xlane.f32.xlu0 %v232
    %v261 = vpop.xlane.xlu0 %260
    %262 = vadd.xlane.f32.xlu0 %v233
    %v263 = vpop.xlane.xlu0 %262
    %264 = vadd.xlane.f32.xlu0 %v234
    %v265 = vpop.xlane.xlu0 %264
    %266 = vadd.xlane.f32.xlu0 %v235
    %v267 = vpop.xlane.xlu0 %266
    %v268 = vmax.f32 %v237, 1e-24
    %v269 = vmax.f32 %v239, 1e-24
    %v270 = vmax.f32 %v241, 1e-24
    %v271 = vmax.f32 %v243, 1e-24
    %v272 = vmax.f32 %v245, 1e-24
    %v273 = vmax.f32 %v247, 1e-24
    %v274 = vmax.f32 %v249, 1e-24
    %v275 = vmax.f32 %v251, 1e-24
    %v276 = vmax.f32 %v253, 1e-24
    %v277 = vmax.f32 %v255, 1e-24
    %v278 = vmax.f32 %v257, 1e-24
    %v279 = vmax.f32 %v259, 1e-24
    %v280 = vmax.f32 %v261, 1e-24
    %v281 = vmax.f32 %v263, 1e-24
    %v282 = vmax.f32 %v265, 1e-24
    %v283 = vmax.f32 %v267, 1e-24
    %v284 = vrsqrt.pop %v268
    %v285 = vmul.f32 %v284, %v268
    %v286 = vmul.f32 %v285, %v284
    %v287 = vmul.f32 0.5, %v286
    %v288 = vsub.f32 1.5, %v287
    %v289 = vmul.f32 %v284, %v288
    %vm290 = vweird.f32 %v268
    %vm291 = vweird.f32 %v284
    %vm292 = vmor %vm290, %vm291
    %v293 = vsel %vm292, %v284, %v289
    %v294 = vrsqrt.pop %v269
    %v295 = vmul.f32 %v294, %v269
    %v296 = vmul.f32 %v295, %v294
    %v297 = vmul.f32 0.5, %v296
    %v298 = vsub.f32 1.5, %v297
    %v299 = vmul.f32 %v294, %v298
    %vm300 = vweird.f32 %v269
    %vm301 = vweird.f32 %v294
    %vm302 = vmor %vm300, %vm301
    %v303 = vsel %vm302, %v294, %v299
    %v304 = vrsqrt.pop %v270
    %v305 = vmul.f32 %v304, %v270
    %v306 = vmul.f32 %v305, %v304
    %v307 = vmul.f32 0.5, %v306
    %v308 = vsub.f32 1.5, %v307
    %v309 = vmul.f32 %v304, %v308
    %vm310 = vweird.f32 %v270
    %vm311 = vweird.f32 %v304
    %vm312 = vmor %vm310, %vm311
    %v313 = vsel %vm312, %v304, %v309
    %v314 = vrsqrt.pop %v271
    %v315 = vmul.f32 %v314, %v271
    %v316 = vmul.f32 %v315, %v314
    %v317 = vmul.f32 0.5, %v316
    %v318 = vsub.f32 1.5, %v317
    %v319 = vmul.f32 %v314, %v318
    %vm320 = vweird.f32 %v271
    %vm321 = vweird.f32 %v314
    %vm322 = vmor %vm320, %vm321
    %v323 = vsel %vm322, %v314, %v319
    %v324 = vrsqrt.pop %v272
    %v325 = vmul.f32 %v324, %v272
    %v326 = vmul.f32 %v325, %v324
    %v327 = vmul.f32 0.5, %v326
    %v328 = vsub.f32 1.5, %v327
    %v329 = vmul.f32 %v324, %v328
    %vm330 = vweird.f32 %v272
    %vm331 = vweird.f32 %v324
    %vm332 = vmor %vm330, %vm331
    %v333 = vsel %vm332, %v324, %v329
    %v334 = vrsqrt.pop %v273
    %v335 = vmul.f32 %v334, %v273
    %v336 = vmul.f32 %v335, %v334
    %v337 = vmul.f32 0.5, %v336
    %v338 = vsub.f32 1.5, %v337
    %v339 = vmul.f32 %v334, %v338
    %vm340 = vweird.f32 %v273
    %vm341 = vweird.f32 %v334
    %vm342 = vmor %vm340, %vm341
    %v343 = vsel %vm342, %v334, %v339
    %v344 = vrsqrt.pop %v274
    %v345 = vmul.f32 %v344, %v274
    %v346 = vmul.f32 %v345, %v344
    %v347 = vmul.f32 0.5, %v346
    %v348 = vsub.f32 1.5, %v347
    %v349 = vmul.f32 %v344, %v348
    %vm350 = vweird.f32 %v274
    %vm351 = vweird.f32 %v344
    %vm352 = vmor %vm350, %vm351
    %v353 = vsel %vm352, %v344, %v349
    %v354 = vrsqrt.pop %v275
    %v355 = vmul.f32 %v354, %v275
    %v356 = vmul.f32 %v355, %v354
    %v357 = vmul.f32 0.5, %v356
    %v358 = vsub.f32 1.5, %v357
    %v359 = vmul.f32 %v354, %v358
    %vm360 = vweird.f32 %v275
    %vm361 = vweird.f32 %v354
    %vm362 = vmor %vm360, %vm361
    %v363 = vsel %vm362, %v354, %v359
    %v364 = vrsqrt.pop %v276
    %v365 = vmul.f32 %v364, %v276
    %v366 = vmul.f32 %v365, %v364
    %v367 = vmul.f32 0.5, %v366
    %v368 = vsub.f32 1.5, %v367
    %v369 = vmul.f32 %v364, %v368
    %vm370 = vweird.f32 %v276
    %vm371 = vweird.f32 %v364
    %vm372 = vmor %vm370, %vm371
    %v373 = vsel %vm372, %v364, %v369
    %v374 = vrsqrt.pop %v277
    %v375 = vmul.f32 %v374, %v277
    %v376 = vmul.f32 %v375, %v374
    %v377 = vmul.f32 0.5, %v376
    %v378 = vsub.f32 1.5, %v377
    %v379 = vmul.f32 %v374, %v378
    %vm380 = vweird.f32 %v277
    %vm381 = vweird.f32 %v374
    %vm382 = vmor %vm380, %vm381
    %v383 = vsel %vm382, %v374, %v379
    %v384 = vrsqrt.pop %v278
    %v385 = vmul.f32 %v384, %v278
    %v386 = vmul.f32 %v385, %v384
    %v387 = vmul.f32 0.5, %v386
    %v388 = vsub.f32 1.5, %v387
    %v389 = vmul.f32 %v384, %v388
    %vm390 = vweird.f32 %v278
    %vm391 = vweird.f32 %v384
    %vm392 = vmor %vm390, %vm391
    %v393 = vsel %vm392, %v384, %v389
    %v394 = vrsqrt.pop %v279
    %v395 = vmul.f32 %v394, %v279
    %v396 = vmul.f32 %v395, %v394
    %v397 = vmul.f32 0.5, %v396
    %v398 = vsub.f32 1.5, %v397
    %v399 = vmul.f32 %v394, %v398
    %vm400 = vweird.f32 %v279
    %vm401 = vweird.f32 %v394
    %vm402 = vmor %vm400, %vm401
    %v403 = vsel %vm402, %v394, %v399
    %v404 = vrsqrt.pop %v280
    %v405 = vmul.f32 %v404, %v280
    %v406 = vmul.f32 %v405, %v404
    %v407 = vmul.f32 0.5, %v406
    %v408 = vsub.f32 1.5, %v407
    %v409 = vmul.f32 %v404, %v408
    %vm410 = vweird.f32 %v280
    %vm411 = vweird.f32 %v404
    %vm412 = vmor %vm410, %vm411
    %v413 = vsel %vm412, %v404, %v409
    %v414 = vrsqrt.pop %v281
    %v415 = vmul.f32 %v414, %v281
    %v416 = vmul.f32 %v415, %v414
    %v417 = vmul.f32 0.5, %v416
    %v418 = vsub.f32 1.5, %v417
    %v419 = vmul.f32 %v414, %v418
    %vm420 = vweird.f32 %v281
    %vm421 = vweird.f32 %v414
    %vm422 = vmor %vm420, %vm421
    %v423 = vsel %vm422, %v414, %v419
    %v424 = vrsqrt.pop %v282
    %v425 = vmul.f32 %v424, %v282
    %v426 = vmul.f32 %v425, %v424
    %v427 = vmul.f32 0.5, %v426
    %v428 = vsub.f32 1.5, %v427
    %v429 = vmul.f32 %v424, %v428
    %vm430 = vweird.f32 %v282
    %vm431 = vweird.f32 %v424
    %vm432 = vmor %vm430, %vm431
    %v433 = vsel %vm432, %v424, %v429
    %v434 = vrsqrt.pop %v283
    %v435 = vmul.f32 %v434, %v283
    %v436 = vmul.f32 %v435, %v434
    %v437 = vmul.f32 0.5, %v436
    %v438 = vsub.f32 1.5, %v437
    %v439 = vmul.f32 %v434, %v438
    %vm440 = vweird.f32 %v283
    %vm441 = vweird.f32 %v434
    %vm442 = vmor %vm440, %vm441
    %v443 = vsel %vm442, %v434, %v439
    %v444 = vmul.f32 %v204, %v293
    %v445 = vmul.f32 %v205, %v303
    %v446 = vmul.f32 %v206, %v313
    %v447 = vmul.f32 %v207, %v323
    %v448 = vmul.f32 %v208, %v333
    %v449 = vmul.f32 %v209, %v343
    %v450 = vmul.f32 %v210, %v353
    %v451 = vmul.f32 %v211, %v363
    %v452 = vmul.f32 %v212, %v373
    %v453 = vmul.f32 %v213, %v383
    %v454 = vmul.f32 %v214, %v393
    %v455 = vmul.f32 %v215, %v403
    %v456 = vmul.f32 %v216, %v413
    %v457 = vmul.f32 %v217, %v423
    %v458 = vmul.f32 %v218, %v433
    %v459 = vmul.f32 %v219, %v443
    %460 = vst [vmem:[%s3] sm:$0xff] %v444
    %461 = vst [vmem:[%s3 + $0x8] sm:$0xff] %v445
    %462 = vst [vmem:[%s3 + $0x10] sm:$0xff] %v446
    %463 = vst [vmem:[%s3 + $0x18] sm:$0xff] %v447
    %464 = vst [vmem:[%s3 + $0x20] sm:$0xff] %v448
    %465 = vst [vmem:[%s3 + $0x28] sm:$0xff] %v449
    %466 = vst [vmem:[%s3 + $0x30] sm:$0xff] %v450
    %467 = vst [vmem:[%s3 + $0x38] sm:$0xff] %v451
    %468 = vst [vmem:[%s3 + $0x40] sm:$0xff] %v452
    %469 = vst [vmem:[%s3 + $0x48] sm:$0xff] %v453
    %470 = vst [vmem:[%s3 + $0x50] sm:$0xff] %v454
    %471 = vst [vmem:[%s3 + $0x58] sm:$0xff] %v455
    %472 = vst [vmem:[%s3 + $0x60] sm:$0xff] %v456
    %473 = vst [vmem:[%s3 + $0x68] sm:$0xff] %v457
    %474 = vst [vmem:[%s3 + $0x70] sm:$0xff] %v458
    %475 = vst [vmem:[%s3 + $0x78] sm:$0xff] %v459
  $region21: #{gcns_forward.3} parent=0 // pred_fallthru
    _
  // Predicated region
  $region22: #{gcns_forward.3} parent=0 // pred_check
    _
  $region23: #{gcns_forward.3} parent=0 // pred_check_branch
    %477 = sbr.rel (0) target = $region25
  $region24: #{gcns_forward.3} parent=0 // pred_region
    _
  $region25: #{gcns_forward.3} parent=0 // pred_fallthru
    _
  // Predicated region
  $region26: #{gcns_forward.3} parent=0 // pred_check
    _
  $region27: #{gcns_forward.3} parent=0 // pred_check_branch
    %479 = sbr.rel (0) target = $region29
  $region28: #{gcns_forward.3} parent=0 // pred_region
    _
  $region29: #{gcns_forward.3} parent=0 // pred_fallthru
    _

// kernel: gcns_forward.2
$region0: #{gcns_forward.2}
  #allocation0 [shape = 'u32[]', space=smem, size = 0x4, offset = 0x4, fixed_abs, tag = 'smem constant byte address 0x4 - core index']
  #allocation1 [shape = 'u32[72,128]{1,0:T(1,128)}', space=vmem, size = 0x9000, scoped, tag = 'internal scratch']
  #allocation2 [shape = 'f32[128,128]{1,0:T(8,128)}', space=vmem, size = 0x10000, scoped, tag = 'scratch operand']
  %s0 = inlined_call_operand.vmem [shape: f32[128,128], index: 0, kind: input, shape index: {}]
  %s1 = inlined_call_operand.vmem [shape: f32[128,128], index: 1, kind: input, shape index: {}]
  %s2 = inlined_call_operand.vmem [shape: f32[1,128], index: 2, kind: input, shape index: {}]
  %s3 = inlined_call_operand.vmem [shape: f32[128,128], index: 3, kind: input, shape index: {}]
  %s4 = inlined_call_operand.vmem [shape: f32[128,128], index: 4, kind: output, shape index: {}]
  %s5 = sld [smem:[#allocation0]]
  $region34: #{gcns_forward.2} parent=0
    _
  %s7 = ssub.s32 1, %s5
  %s8 = scalar_select 0, %s7, %s5
  // Predicated region
  $region2: #{gcns_forward.2} parent=0 // pred_check
    _
  $region3: #{gcns_forward.2} parent=0 // pred_check_branch
    %10 = sbr.rel (0) target = $region5
  $region4: #{gcns_forward.2} parent=0 // pred_region
    _
  $region5: #{gcns_forward.2} parent=0 // pred_fallthru
    _
  // Predicated region
  $region6: #{gcns_forward.2} parent=0 // pred_check
    _
  $region7: #{gcns_forward.2} parent=0 // pred_check_branch
    %12 = sbr.rel (0) target = $region9
  $region8: #{gcns_forward.2} parent=0 // pred_region
    _
  $region9: #{gcns_forward.2} parent=0 // pred_fallthru
    _
  // Predicated region
  $region10: #{gcns_forward.2} parent=0 // pred_check
    _
  $region11: #{gcns_forward.2} parent=0 // pred_check_branch
    %14 = sbr.rel (0) target = $region13
  $region12: #{gcns_forward.2} parent=0 // pred_region
    _
  $region13: #{gcns_forward.2} parent=0 // pred_fallthru
    _
  // Predicated region
  $region14: #{gcns_forward.2} parent=0 // pred_check
    _
  $region15: #{gcns_forward.2} parent=0 // pred_check_branch
    %16 = sbr.rel (0) target = $region17
  $region16: #{gcns_forward.2} parent=0 // pred_region
    _
  $region17: #{gcns_forward.2} parent=0 // pred_fallthru
    _
  %p17 = scmp.eq.s32.totalorder 0, 0
  // Predicated region
  $region18: #{gcns_forward.2} parent=0 // pred_check
    %p18 = pneg %p17
  $region19: #{gcns_forward.2} parent=0 // pred_check_branch
    %20 = sbr.rel (%p18) target = $region21
  $region20: #{gcns_forward.2} parent=0 // pred_region
    %21 = vst [vmem:[#allocation2] sm:$0xff] 0.0
    %22 = vst [vmem:[#allocation2 + $0x8] sm:$0xff] 0.0
    %23 = vst [vmem:[#allocation2 + $0x10] sm:$0xff] 0.0
    %24 = vst [vmem:[#allocation2 + $0x18] sm:$0xff] 0.0
    %25 = vst [vmem:[#allocation2 + $0x20] sm:$0xff] 0.0
    %26 = vst [vmem:[#allocation2 + $0x28] sm:$0xff] 0.0
    %27 = vst [vmem:[#allocation2 + $0x30] sm:$0xff] 0.0
    %28 = vst [vmem:[#allocation2 + $0x38] sm:$0xff] 0.0
    %29 = vst [vmem:[#allocation2 + $0x40] sm:$0xff] 0.0
    %30 = vst [vmem:[#allocation2 + $0x48] sm:$0xff] 0.0
    %31 = vst [vmem:[#allocation2 + $0x50] sm:$0xff] 0.0
    %32 = vst [vmem:[#allocation2 + $0x58] sm:$0xff] 0.0
    %33 = vst [vmem:[#allocation2 + $0x60] sm:$0xff] 0.0
    %34 = vst [vmem:[#allocation2 + $0x68] sm:$0xff] 0.0
    %35 = vst [vmem:[#allocation2 + $0x70] sm:$0xff] 0.0
    %36 = vst [vmem:[#allocation2 + $0x78] sm:$0xff] 0.0
  $region21: #{gcns_forward.2} parent=0 // pred_fallthru
    _
  %s37 = smul.u32 0, 128
  %s38 = scalar_lea.vmem %s1, %s37
  %v39 = vld [vmem:[%s38] sm:$0xff]
  %v40 = vld [vmem:[%s38 + $0x8] sm:$0xff]
  %v41 = vld [vmem:[%s38 + $0x10] sm:$0xff]
  %v42 = vld [vmem:[%s38 + $0x18] sm:$0xff]
  %v43 = vld [vmem:[%s38 + $0x20] sm:$0xff]
  %v44 = vld [vmem:[%s38 + $0x28] sm:$0xff]
  %v45 = vld [vmem:[%s38 + $0x30] sm:$0xff]
  %v46 = vld [vmem:[%s38 + $0x38] sm:$0xff]
  %v47 = vld [vmem:[%s38 + $0x40] sm:$0xff]
  %v48 = vld [vmem:[%s38 + $0x48] sm:$0xff]
  %v49 = vld [vmem:[%s38 + $0x50] sm:$0xff]
  %v50 = vld [vmem:[%s38 + $0x58] sm:$0xff]
  %v51 = vld [vmem:[%s38 + $0x60] sm:$0xff]
  %v52 = vld [vmem:[%s38 + $0x68] sm:$0xff]
  %v53 = vld [vmem:[%s38 + $0x70] sm:$0xff]
  %v54 = vld [vmem:[%s38 + $0x78] sm:$0xff]
  %v55 = vld [vmem:[#allocation2] sm:$0xff]
  %v56 = vld [vmem:[#allocation2 + $0x8] sm:$0xff]
  %v57 = vld [vmem:[#allocation2 + $0x10] sm:$0xff]
  %v58 = vld [vmem:[#allocation2 + $0x18] sm:$0xff]
  %v59 = vld [vmem:[#allocation2 + $0x20] sm:$0xff]
  %v60 = vld [vmem:[#allocation2 + $0x28] sm:$0xff]
  %v61 = vld [vmem:[#allocation2 + $0x30] sm:$0xff]
  %v62 = vld [vmem:[#allocation2 + $0x38] sm:$0xff]
  %v63 = vld [vmem:[#allocation2 + $0x40] sm:$0xff]
  %v64 = vld [vmem:[#allocation2 + $0x48] sm:$0xff]
  %v65 = vld [vmem:[#allocation2 + $0x50] sm:$0xff]
  %v66 = vld [vmem:[#allocation2 + $0x58] sm:$0xff]
  %v67 = vld [vmem:[#allocation2 + $0x60] sm:$0xff]
  %v68 = vld [vmem:[#allocation2 + $0x68] sm:$0xff]
  %v69 = vld [vmem:[#allocation2 + $0x70] sm:$0xff]
  %v70 = vld [vmem:[#allocation2 + $0x78] sm:$0xff]
  %v71 = vld [vmem:[%s0] sm:$0xff]
  %v72 = vld [vmem:[%s0 + $0x8] sm:$0xff]
  %v73 = vld [vmem:[%s0 + $0x10] sm:$0xff]
  %v74 = vld [vmem:[%s0 + $0x18] sm:$0xff]
  %v75 = vld [vmem:[%s0 + $0x20] sm:$0xff]
  %v76 = vld [vmem:[%s0 + $0x28] sm:$0xff]
  %v77 = vld [vmem:[%s0 + $0x30] sm:$0xff]
  %v78 = vld [vmem:[%s0 + $0x38] sm:$0xff]
  %v79 = vld [vmem:[%s0 + $0x40] sm:$0xff]
  %v80 = vld [vmem:[%s0 + $0x48] sm:$0xff]
  %v81 = vld [vmem:[%s0 + $0x50] sm:$0xff]
  %v82 = vld [vmem:[%s0 + $0x58] sm:$0xff]
  %v83 = vld [vmem:[%s0 + $0x60] sm:$0xff]
  %v84 = vld [vmem:[%s0 + $0x68] sm:$0xff]
  %v85 = vld [vmem:[%s0 + $0x70] sm:$0xff]
  %v86 = vld [vmem:[%s0 + $0x78] sm:$0xff]
  %87 = vmatpush.msra.mxu0 %v54
  %88 = vmatpush.msra.mxu0 %v53
  %89 = vmatpush.msra.mxu0 %v52
  %90 = vmatpush.msra.mxu0 %v51
  %91 = vmatpush.msra.mxu0 %v50
  %92 = vmatpush.msra.mxu0 %v49
  %93 = vmatpush.msra.mxu0 %v48
  %94 = vmatpush.msra.mxu0 %v47
  %95 = vmatpush.msra.mxu0 %v46
  %96 = vmatpush.msra.mxu0 %v45
  %97 = vmatpush.msra.mxu0 %v44
  %98 = vmatpush.msra.mxu0 %v43
  %99 = vmatpush.msra.mxu0 %v42
  %100 = vmatpush.msra.mxu0 %v41
  %101 = vmatpush.msra.mxu0 %v40
  %102 = vmatpush.msra.mxu0 %v39
  %103 = vmatmul.f32.gmra.mxu0 %v71
  %v104 = vpop.f32.mrf.mxu0
  %v105 = vadd.f32 0.0, %v104
  %106 = vmatmul.f32.gmra.mxu0 %v72
  %v107 = vpop.f32.mrf.mxu0
  %v108 = vadd.f32 0.0, %v107
  %109 = vmatmul.f32.gmra.mxu0 %v73
  %v110 = vpop.f32.mrf.mxu0
  %v111 = vadd.f32 0.0, %v110
  %112 = vmatmul.f32.gmra.mxu0 %v74
  %v113 = vpop.f32.mrf.mxu0
  %v114 = vadd.f32 0.0, %v113
  %115 = vmatmul.f32.gmra.mxu0 %v75
  %v116 = vpop.f32.mrf.mxu0
  %v117 = vadd.f32 0.0, %v116
  %118 = vmatmul.f32.gmra.mxu0 %v76
  %v119 = vpop.f32.mrf.mxu0
  %v120 = vadd.f32 0.0, %v119
  %121 = vmatmul.f32.gmra.mxu0 %v77
  %v122 = vpop.f32.mrf.mxu0
  %v123 = vadd.f32 0.0, %v122
  %124 = vmatmul.f32.gmra.mxu0 %v78
  %v125 = vpop.f32.mrf.mxu0
  %v126 = vadd.f32 0.0, %v125
  %127 = vmatmul.f32.gmra.mxu0 %v79
  %v128 = vpop.f32.mrf.mxu0
  %v129 = vadd.f32 0.0, %v128
  %130 = vmatmul.f32.gmra.mxu0 %v80
  %v131 = vpop.f32.mrf.mxu0
  %v132 = vadd.f32 0.0, %v131
  %133 = vmatmul.f32.gmra.mxu0 %v81
  %v134 = vpop.f32.mrf.mxu0
  %v135 = vadd.f32 0.0, %v134
  %136 = vmatmul.f32.gmra.mxu0 %v82
  %v137 = vpop.f32.mrf.mxu0
  %v138 = vadd.f32 0.0, %v137
  %139 = vmatmul.f32.gmra.mxu0 %v83
  %v140 = vpop.f32.mrf.mxu0
  %v141 = vadd.f32 0.0, %v140
  %142 = vmatmul.f32.gmra.mxu0 %v84
  %v143 = vpop.f32.mrf.mxu0
  %v144 = vadd.f32 0.0, %v143
  %145 = vmatmul.f32.gmra.mxu0 %v85
  %v146 = vpop.f32.mrf.mxu0
  %v147 = vadd.f32 0.0, %v146
  %148 = vmatmul.f32.gmra.mxu0 %v86
  %v149 = vpop.f32.mrf.mxu0
  %v150 = vadd.f32 0.0, %v149
  %151 = vdwg.mxu0
  %v152 = vadd.f32 %v55, %v105
  %v153 = vadd.f32 %v56, %v108
  %v154 = vadd.f32 %v57, %v111
  %v155 = vadd.f32 %v58, %v114
  %v156 = vadd.f32 %v59, %v117
  %v157 = vadd.f32 %v60, %v120
  %v158 = vadd.f32 %v61, %v123
  %v159 = vadd.f32 %v62, %v126
  %v160 = vadd.f32 %v63, %v129
  %v161 = vadd.f32 %v64, %v132
  %v162 = vadd.f32 %v65, %v135
  %v163 = vadd.f32 %v66, %v138
  %v164 = vadd.f32 %v67, %v141
  %v165 = vadd.f32 %v68, %v144
  %v166 = vadd.f32 %v69, %v147
  %v167 = vadd.f32 %v70, %v150
  %168 = vst [vmem:[#allocation2] sm:$0xff] %v152
  %169 = vst [vmem:[#allocation2 + $0x8] sm:$0xff] %v153
  %170 = vst [vmem:[#allocation2 + $0x10] sm:$0xff] %v154
  %171 = vst [vmem:[#allocation2 + $0x18] sm:$0xff] %v155
  %172 = vst [vmem:[#allocation2 + $0x20] sm:$0xff] %v156
  %173 = vst [vmem:[#allocation2 + $0x28] sm:$0xff] %v157
  %174 = vst [vmem:[#allocation2 + $0x30] sm:$0xff] %v158
  %175 = vst [vmem:[#allocation2 + $0x38] sm:$0xff] %v159
  %176 = vst [vmem:[#allocation2 + $0x40] sm:$0xff] %v160
  %177 = vst [vmem:[#allocation2 + $0x48] sm:$0xff] %v161
  %178 = vst [vmem:[#allocation2 + $0x50] sm:$0xff] %v162
  %179 = vst [vmem:[#allocation2 + $0x58] sm:$0xff] %v163
  %180 = vst [vmem:[#allocation2 + $0x60] sm:$0xff] %v164
  %181 = vst [vmem:[#allocation2 + $0x68] sm:$0xff] %v165
  %182 = vst [vmem:[#allocation2 + $0x70] sm:$0xff] %v166
  %183 = vst [vmem:[#allocation2 + $0x78] sm:$0xff] %v167
  // Predicated region
  $region22: #{gcns_forward.2} parent=0 // pred_check
    %p184 = pneg %p17
  $region23: #{gcns_forward.2} parent=0 // pred_check_branch
    %186 = sbr.rel (%p184) target = $region25
  $region24: #{gcns_forward.2} parent=0 // pred_region
    %v187 = vld [vmem:[#allocation2] sm:$0xff]
    %v188 = vld [vmem:[#allocation2 + $0x8] sm:$0xff]
    %v189 = vld [vmem:[#allocation2 + $0x10] sm:$0xff]
    %v190 = vld [vmem:[#allocation2 + $0x18] sm:$0xff]
    %v191 = vld [vmem:[#allocation2 + $0x20] sm:$0xff]
    %v192 = vld [vmem:[#allocation2 + $0x28] sm:$0xff]
    %v193 = vld [vmem:[#allocation2 + $0x30] sm:$0xff]
    %v194 = vld [vmem:[#allocation2 + $0x38] sm:$0xff]
    %v195 = vld [vmem:[#allocation2 + $0x40] sm:$0xff]
    %v196 = vld [vmem:[#allocation2 + $0x48] sm:$0xff]
    %v197 = vld [vmem:[#allocation2 + $0x50] sm:$0xff]
    %v198 = vld [vmem:[#allocation2 + $0x58] sm:$0xff]
    %v199 = vld [vmem:[#allocation2 + $0x60] sm:$0xff]
    %v200 = vld [vmem:[#allocation2 + $0x68] sm:$0xff]
    %v201 = vld [vmem:[#allocation2 + $0x70] sm:$0xff]
    %v202 = vld [vmem:[#allocation2 + $0x78] sm:$0xff]
    %v203 = vld [vmem:[%s2] sm:$0x1]
    %v205 = vperm.slane %v203, 0
    %v207 = vadd.f32 %v187, %v205
    %v208 = vadd.f32 %v188, %v205
    %v209 = vadd.f32 %v189, %v205
    %v210 = vadd.f32 %v190, %v205
    %v211 = vadd.f32 %v191, %v205
    %v212 = vadd.f32 %v192, %v205
    %v213 = vadd.f32 %v193, %v205
    %v214 = vadd.f32 %v194, %v205
    %v215 = vadd.f32 %v195, %v205
    %v216 = vadd.f32 %v196, %v205
    %v217 = vadd.f32 %v197, %v205
    %v218 = vadd.f32 %v198, %v205
    %v219 = vadd.f32 %v199, %v205
    %v220 = vadd.f32 %v200, %v205
    %v221 = vadd.f32 %v201, %v205
    %v222 = vadd.f32 %v202, %v205
    %v223 = vmax.f32 %v207, 0.0
    %v224 = vmax.f32 %v208, 0.0
    %v225 = vmax.f32 %v209, 0.0
    %v226 = vmax.f32 %v210, 0.0
    %v227 = vmax.f32 %v211, 0.0
    %v228 = vmax.f32 %v212, 0.0
    %v229 = vmax.f32 %v213, 0.0
    %v230 = vmax.f32 %v214, 0.0
    %v231 = vmax.f32 %v215, 0.0
    %v232 = vmax.f32 %v216, 0.0
    %v233 = vmax.f32 %v217, 0.0
    %v234 = vmax.f32 %v218, 0.0
    %v235 = vmax.f32 %v219, 0.0
    %v236 = vmax.f32 %v220, 0.0
    %v237 = vmax.f32 %v221, 0.0
    %v238 = vmax.f32 %v222, 0.0
    %v239 = vld [vmem:[%s3] sm:$0xff]
    %v240 = vld [vmem:[%s3 + $0x8] sm:$0xff]
    %v241 = vld [vmem:[%s3 + $0x10] sm:$0xff]
    %v242 = vld [vmem:[%s3 + $0x18] sm:$0xff]
    %v243 = vld [vmem:[%s3 + $0x20] sm:$0xff]
    %v244 = vld [vmem:[%s3 + $0x28] sm:$0xff]
    %v245 = vld [vmem:[%s3 + $0x30] sm:$0xff]
    %v246 = vld [vmem:[%s3 + $0x38] sm:$0xff]
    %v247 = vld [vmem:[%s3 + $0x40] sm:$0xff]
    %v248 = vld [vmem:[%s3 + $0x48] sm:$0xff]
    %v249 = vld [vmem:[%s3 + $0x50] sm:$0xff]
    %v250 = vld [vmem:[%s3 + $0x58] sm:$0xff]
    %v251 = vld [vmem:[%s3 + $0x60] sm:$0xff]
    %v252 = vld [vmem:[%s3 + $0x68] sm:$0xff]
    %v253 = vld [vmem:[%s3 + $0x70] sm:$0xff]
    %v254 = vld [vmem:[%s3 + $0x78] sm:$0xff]
    %255 = vmatpush.msra.mxu0 %v254
    %256 = vmatpush.msra.mxu0 %v253
    %257 = vmatpush.msra.mxu0 %v252
    %258 = vmatpush.msra.mxu0 %v251
    %259 = vmatpush.msra.mxu0 %v250
    %260 = vmatpush.msra.mxu0 %v249
    %261 = vmatpush.msra.mxu0 %v248
    %262 = vmatpush.msra.mxu0 %v247
    %263 = vmatpush.msra.mxu0 %v246
    %264 = vmatpush.msra.mxu0 %v245
    %265 = vmatpush.msra.mxu0 %v244
    %266 = vmatpush.msra.mxu0 %v243
    %267 = vmatpush.msra.mxu0 %v242
    %268 = vmatpush.msra.mxu0 %v241
    %269 = vmatpush.msra.mxu0 %v240
    %270 = vmatpush.msra.mxu0 %v239
    %271 = vmatmul.f32.gmra.mxu0 %v223
    %v272 = vpop.f32.mrf.mxu0
    %v273 = vadd.f32 0.0, %v272
    %274 = vmatmul.f32.gmra.mxu0 %v224
    %v275 = vpop.f32.mrf.mxu0
    %v276 = vadd.f32 0.0, %v275
    %277 = vmatmul.f32.gmra.mxu0 %v225
    %v278 = vpop.f32.mrf.mxu0
    %v279 = vadd.f32 0.0, %v278
    %280 = vmatmul.f32.gmra.mxu0 %v226
    %v281 = vpop.f32.mrf.mxu0
    %v282 = vadd.f32 0.0, %v281
    %283 = vmatmul.f32.gmra.mxu0 %v227
    %v284 = vpop.f32.mrf.mxu0
    %v285 = vadd.f32 0.0, %v284
    %286 = vmatmul.f32.gmra.mxu0 %v228
    %v287 = vpop.f32.mrf.mxu0
    %v288 = vadd.f32 0.0, %v287
    %289 = vmatmul.f32.gmra.mxu0 %v229
    %v290 = vpop.f32.mrf.mxu0
    %v291 = vadd.f32 0.0, %v290
    %292 = vmatmul.f32.gmra.mxu0 %v230
    %v293 = vpop.f32.mrf.mxu0
    %v294 = vadd.f32 0.0, %v293
    %295 = vmatmul.f32.gmra.mxu0 %v231
    %v296 = vpop.f32.mrf.mxu0
    %v297 = vadd.f32 0.0, %v296
    %298 = vmatmul.f32.gmra.mxu0 %v232
    %v299 = vpop.f32.mrf.mxu0
    %v300 = vadd.f32 0.0, %v299
    %301 = vmatmul.f32.gmra.mxu0 %v233
    %v302 = vpop.f32.mrf.mxu0
    %v303 = vadd.f32 0.0, %v302
    %304 = vmatmul.f32.gmra.mxu0 %v234
    %v305 = vpop.f32.mrf.mxu0
    %v306 = vadd.f32 0.0, %v305
    %307 = vmatmul.f32.gmra.mxu0 %v235
    %v308 = vpop.f32.mrf.mxu0
    %v309 = vadd.f32 0.0, %v308
    %310 = vmatmul.f32.gmra.mxu0 %v236
    %v311 = vpop.f32.mrf.mxu0
    %v312 = vadd.f32 0.0, %v311
    %313 = vmatmul.f32.gmra.mxu0 %v237
    %v314 = vpop.f32.mrf.mxu0
    %v315 = vadd.f32 0.0, %v314
    %316 = vmatmul.f32.gmra.mxu0 %v238
    %v317 = vpop.f32.mrf.mxu0
    %v318 = vadd.f32 0.0, %v317
    %319 = vdwg.mxu0
    %320 = vst [vmem:[%s4] sm:$0xff] %v273
    %321 = vst [vmem:[%s4 + $0x8] sm:$0xff] %v276
    %322 = vst [vmem:[%s4 + $0x10] sm:$0xff] %v279
    %323 = vst [vmem:[%s4 + $0x18] sm:$0xff] %v282
    %324 = vst [vmem:[%s4 + $0x20] sm:$0xff] %v285
    %325 = vst [vmem:[%s4 + $0x28] sm:$0xff] %v288
    %326 = vst [vmem:[%s4 + $0x30] sm:$0xff] %v291
    %327 = vst [vmem:[%s4 + $0x38] sm:$0xff] %v294
    %328 = vst [vmem:[%s4 + $0x40] sm:$0xff] %v297
    %329 = vst [vmem:[%s4 + $0x48] sm:$0xff] %v300
    %330 = vst [vmem:[%s4 + $0x50] sm:$0xff] %v303
    %331 = vst [vmem:[%s4 + $0x58] sm:$0xff] %v306
    %332 = vst [vmem:[%s4 + $0x60] sm:$0xff] %v309
    %333 = vst [vmem:[%s4 + $0x68] sm:$0xff] %v312
    %334 = vst [vmem:[%s4 + $0x70] sm:$0xff] %v315
    %335 = vst [vmem:[%s4 + $0x78] sm:$0xff] %v318
  $region25: #{gcns_forward.2} parent=0 // pred_fallthru
    _
  // Predicated region
  $region26: #{gcns_forward.2} parent=0 // pred_check
    _
  $region27: #{gcns_forward.2} parent=0 // pred_check_branch
    %337 = sbr.rel (0) target = $region29
  $region28: #{gcns_forward.2} parent=0 // pred_region
    _
  $region29: #{gcns_forward.2} parent=0 // pred_fallthru
    _
  // Predicated region
  $region30: #{gcns_forward.2} parent=0 // pred_check
    _
  $region31: #{gcns_forward.2} parent=0 // pred_check_branch
    %339 = sbr.rel (0) target = $region33
  $region32: #{gcns_forward.2} parent=0 // pred_region
    _
  $region33: #{gcns_forward.2} parent=0 // pred_fallthru
    _

</llo_original>
